<compile_context>
chip_gen: v7x
topology: tpu7x:2x2x1
jax: 0.10.0
libtpu: 0.0.40
codegen_flags: <defaults>
</compile_context>

<pallas_src>
import functools

import jax
import jax.numpy as jnp
from jax.experimental import pallas as pl
from jax.experimental.pallas import tpu as pltpu


def _round_up(x, m):
    return ((x + m - 1) // m) * m


def _lipswish(x):
    # LipSwish = 0.909 * x * sigmoid(x); sigmoid runs on the EUP slot.
    return 0.909 * x * jax.nn.sigmoid(x)


def make_mlp_kernel(num_linears, matmul_dtype=jnp.float32):
    """Whole-MLP kernel for one batch tile.

    Kernel args (refs), in order:
      t_ref                         : (1,) f32 in SMEM (the scalar time)
      h_ref                         : (TILE_B, hidden) activation tile
      w0h, w0t, b0, w1, b1, ...     : parameters, resident in VMEM
      out_ref                       : (TILE_B, out_pad) output tile
    """

    def kernel(t_ref, h_ref, *refs):
        out_ref = refs[-1]
        params = refs[:-1]

        t = t_ref[0]                                  # scalar f32 from SMEM
        x = h_ref[...].astype(jnp.float32)

        # ---- layer 0: fuses the torch.cat([t, h]) ---------------------------
        w0h = params[0][...]                          # (hidden, mlp)
        w0t = params[1][...]                          # (1, mlp)  -- t row of W0
        b0 = params[2][...]                           # (1, mlp)
        x = (jnp.dot(x.astype(matmul_dtype), w0h.astype(matmul_dtype),
                     preferred_element_type=jnp.float32)
             + t * w0t + b0)                          # cheap VPU row-broadcast

        # ---- remaining layers: LipSwish then Linear -------------------------
        for i in range(1, num_linears):
            x = _lipswish(x)                          # f32 elementwise
            w = params[3 + 2 * (i - 1)][...]
            b = params[3 + 2 * (i - 1) + 1][...]
            x = jnp.dot(x.astype(matmul_dtype), w.astype(matmul_dtype),
                        preferred_element_type=jnp.float32) + b

        out_ref[...] = x.astype(out_ref.dtype)

    return kernel


class DiscriminatorFunc:
    """JAX/Pallas port of the PyTorch DiscriminatorFunc module."""

    def __init__(self, data_size, hidden_size, mlp_size, num_layers, key,
                 matmul_dtype=jnp.float32, max_tile_b=128):
        self._data_size = data_size
        self._hidden_size = hidden_size
        self._matmul_dtype = matmul_dtype
        self._max_tile_b = max_tile_b

        in_size = 1 + hidden_size
        out_size = hidden_size * (1 + data_size)
        self._out_size = out_size
        self._out_pad = _round_up(out_size, 128)      # lane-dense output stores

        # Layer sizes: in -> mlp -> (mlp)*(num_layers-1) -> out
        sizes = [in_size] + [mlp_size] * num_layers + [out_size]

        # PyTorch-style uniform(+/- 1/sqrt(fan_in)) init.
        self._params = []                              # logical (unpadded) params
        for fan_in, fan_out in zip(sizes[:-1], sizes[1:]):
            key, kw, kb = jax.random.split(key, 3)
            bound = 1.0 / float(fan_in) ** 0.5
            w = jax.random.uniform(kw, (fan_in, fan_out), jnp.float32,
                                   minval=-bound, maxval=bound)
            b = jax.random.uniform(kb, (1, fan_out), jnp.float32,
                                   minval=-bound, maxval=bound)
            self._params.append((w, b))
        self._num_linears = len(self._params)

        # Kernel-layout params:
        #   layer 0 weight split into (t row) + (h rows); last layer zero-padded
        #   so the kernel output last dim is a multiple of 128.
        w0, b0 = self._params[0]
        kernel_params = [w0[1:, :], w0[0:1, :], b0]    # w0_h, w0_t, b0
        for li in range(1, self._num_linears):
            w, b = self._params[li]
            if li == self._num_linears - 1 and self._out_pad != out_size:
                pad = self._out_pad - out_size
                w = jnp.pad(w, ((0, 0), (0, pad)))
                b = jnp.pad(b, ((0, 0), (0, pad)))
            kernel_params.extend([w, b])
        self._kernel_params = kernel_params

    def __call__(self, t, h):
        B = h.shape[0]
        hidden = self._hidden_size

        # Batch tiling: multiple of 8 sublanes, capped at max_tile_b rows.
        tile_b = min(self._max_tile_b, _round_up(B, 8))
        b_pad = _round_up(B, tile_b)
        grid = (b_pad // tile_b,)

        h32 = h.astype(jnp.float32)
        if b_pad != B:
            h32 = jnp.pad(h32, ((0, b_pad - B), (0, 0)))
        t_arr = jnp.asarray(t, jnp.float32).reshape(1)

        in_specs = [
            pl.BlockSpec(memory_space=pltpu.MemorySpace.SMEM),       # t scalar
            pl.BlockSpec((tile_b, hidden), lambda i: (i, 0)),        # h tile
        ]
        # Weights/biases: full-array blocks, constant index -> resident in VMEM.
        for p in self._kernel_params:
            in_specs.append(pl.BlockSpec(p.shape, lambda i: (0, 0)))

        out = pl.pallas_call(
            make_mlp_kernel(self._num_linears, self._matmul_dtype),
            out_shape=jax.ShapeDtypeStruct((b_pad, self._out_pad), jnp.float32),
            grid=grid,
            in_specs=in_specs,
            out_specs=pl.BlockSpec((tile_b, self._out_pad), lambda i: (i, 0)),
            compiler_params=pltpu.CompilerParams(
                dimension_semantics=("parallel",)),
        )(t_arr, h32, *self._kernel_params)

        # Glue: drop batch/feature padding, then .view(B, hidden, 1 + data).
        out = out[:B, :self._out_size]
        return out.reshape(B, self._hidden_size, 1 + self._data_size)


def _reference(t, h, params):
    """Pure-JAX reference (matches the PyTorch forward exactly)."""
    B = h.shape[0]
    t_col = jnp.broadcast_to(jnp.asarray(t, jnp.float32).reshape(1, 1), (B, 1))
    x = jnp.concatenate([t_col, h.astype(jnp.float32)], axis=1)
    n = len(params)
    for i, (w, b) in enumerate(params):
        x = x @ w + b
        if i < n - 1:
            x = _lipswish(x)
    return x


if __name__ == "__main__":
    key = jax.random.PRNGKey(0)
    k_param, k_h, k_h2 = jax.random.split(key, 3)

    # Small shapes consistent with the module.
    data_size = 4
    hidden_size = 32
    mlp_size = 32
    num_layers = 2
    batch = 8

    disc = DiscriminatorFunc(data_size, hidden_size, mlp_size, num_layers, k_param)

    t = jnp.float32(0.5)
    h = jax.random.normal(k_h, (batch, hidden_size), jnp.float32)

    out = jax.block_until_ready(disc(t, h))
    assert out.shape == (batch, hidden_size, 1 + data_size), out.shape

    ref = _reference(t, h, disc._params).reshape(batch, hidden_size,
                                                 1 + data_size)
    err = float(jnp.max(jnp.abs(out - ref)))
    assert err < 1e-4, f"max abs error {err}"

    # Second check: non-multiple-of-tile batch exercises padding + multi-step grid.
    batch2 = 200
    h2 = jax.random.normal(k_h2, (batch2, hidden_size), jnp.float32)
    out2 = jax.block_until_ready(disc(t, h2))
    ref2 = _reference(t, h2, disc._params).reshape(batch2, hidden_size,
                                                   1 + data_size)
    err2 = float(jnp.max(jnp.abs(out2 - ref2)))
    assert err2 < 1e-4, f"max abs error (batch={batch2}) {err2}"

    print("KERNEL_OK")
</pallas_src>

<mosaic_0001>
module attributes {stable_mosaic.version = 11 : i64} {
  func.func @kernel(%arg0: i32, %arg1: memref<1xf32, #tpu.memory_space<smem>>, %arg2: memref<8x32xf32, #tpu.memory_space<vmem>>, %arg3: memref<32x32xf32, #tpu.memory_space<vmem>>, %arg4: memref<1x32xf32, #tpu.memory_space<vmem>>, %arg5: memref<1x32xf32, #tpu.memory_space<vmem>>, %arg6: memref<32x32xf32, #tpu.memory_space<vmem>>, %arg7: memref<1x32xf32, #tpu.memory_space<vmem>>, %arg8: memref<32x256xf32, #tpu.memory_space<vmem>>, %arg9: memref<1x256xf32, #tpu.memory_space<vmem>>, %arg10: memref<8x256xf32, #tpu.memory_space<vmem>>) attributes {dimension_semantics = [#tpu.dimension_semantics<parallel>], iteration_bounds = array<i64: 1>, scalar_prefetch = 0 : i64, scratch_operands = 0 : i64, tpu.core_type = #tpu.core_type<tc>, window_params = [{transform_indices = @transform_0, window_bounds = array<i64: 1>}, {transform_indices = @transform_1, window_bounds = array<i64: 8, 32>}, {pipeline_mode = #tpu.pipeline_mode<synchronous>, transform_indices = @transform_2, window_bounds = array<i64: 32, 32>}, {pipeline_mode = #tpu.pipeline_mode<synchronous>, transform_indices = @transform_3, window_bounds = array<i64: 1, 32>}, {pipeline_mode = #tpu.pipeline_mode<synchronous>, transform_indices = @transform_4, window_bounds = array<i64: 1, 32>}, {pipeline_mode = #tpu.pipeline_mode<synchronous>, transform_indices = @transform_5, window_bounds = array<i64: 32, 32>}, {pipeline_mode = #tpu.pipeline_mode<synchronous>, transform_indices = @transform_6, window_bounds = array<i64: 1, 32>}, {pipeline_mode = #tpu.pipeline_mode<synchronous>, transform_indices = @transform_7, window_bounds = array<i64: 32, 256>}, {pipeline_mode = #tpu.pipeline_mode<synchronous>, transform_indices = @transform_8, window_bounds = array<i64: 1, 256>}, {transform_indices = @transform_9, window_bounds = array<i64: 8, 256>}]} {
    %c0 = arith.constant 0 : index
    %0 = memref.load %arg1[%c0] : memref<1xf32, #tpu.memory_space<smem>>
    %c0_0 = arith.constant 0 : index
    %c0_1 = arith.constant 0 : index
    %1 = vector.load %arg2[%c0_0, %c0_1] : memref<8x32xf32, #tpu.memory_space<vmem>>, vector<8x32xf32>
    %c0_2 = arith.constant 0 : index
    %c0_3 = arith.constant 0 : index
    %2 = vector.load %arg3[%c0_2, %c0_3] : memref<32x32xf32, #tpu.memory_space<vmem>>, vector<32x32xf32>
    %c0_4 = arith.constant 0 : index
    %c0_5 = arith.constant 0 : index
    %3 = vector.load %arg4[%c0_4, %c0_5] : memref<1x32xf32, #tpu.memory_space<vmem>>, vector<1x32xf32>
    %c0_6 = arith.constant 0 : index
    %c0_7 = arith.constant 0 : index
    %4 = vector.load %arg5[%c0_6, %c0_7] : memref<1x32xf32, #tpu.memory_space<vmem>>, vector<1x32xf32>
    %cst = arith.constant dense<0.000000e+00> : vector<8x32xf32>
    %5 = tpu.matmul %1, %2, %cst {dimension_numbers = #tpu.dot_dimension_numbers<[1], [0], [0], [1], [0, 0, 1, 1], [], []>} : vector<8x32xf32>, vector<32x32xf32>, vector<8x32xf32> -> vector<8x32xf32>
    %6 = vector.broadcast %0 : f32 to vector<1x32xf32>
    %7 = arith.mulf %6, %3 : vector<1x32xf32>
    %8 = vector.broadcast %7 : vector<1x32xf32> to vector<8x32xf32>
    %9 = arith.addf %5, %8 : vector<8x32xf32>
    %10 = vector.broadcast %4 : vector<1x32xf32> to vector<8x32xf32>
    %11 = arith.addf %9, %10 : vector<8x32xf32>
    %cst_8 = arith.constant 0.908999979 : f32
    %12 = vector.broadcast %cst_8 : f32 to vector<8x32xf32>
    %13 = arith.mulf %12, %11 : vector<8x32xf32>
    %14 = arith.negf %11 : vector<8x32xf32>
    %15 = math.exp %14 : vector<8x32xf32>
    %cst_9 = arith.constant 1.000000e+00 : f32
    %16 = vector.broadcast %cst_9 : f32 to vector<8x32xf32>
    %17 = arith.addf %16, %15 : vector<8x32xf32>
    %18 = arith.divf %16, %17 : vector<8x32xf32>
    %19 = arith.mulf %13, %18 : vector<8x32xf32>
    %c0_10 = arith.constant 0 : index
    %c0_11 = arith.constant 0 : index
    %20 = vector.load %arg6[%c0_10, %c0_11] : memref<32x32xf32, #tpu.memory_space<vmem>>, vector<32x32xf32>
    %c0_12 = arith.constant 0 : index
    %c0_13 = arith.constant 0 : index
    %21 = vector.load %arg7[%c0_12, %c0_13] : memref<1x32xf32, #tpu.memory_space<vmem>>, vector<1x32xf32>
    %cst_14 = arith.constant dense<0.000000e+00> : vector<8x32xf32>
    %22 = tpu.matmul %19, %20, %cst_14 {dimension_numbers = #tpu.dot_dimension_numbers<[1], [0], [0], [1], [0, 0, 1, 1], [], []>} : vector<8x32xf32>, vector<32x32xf32>, vector<8x32xf32> -> vector<8x32xf32>
    %23 = vector.broadcast %21 : vector<1x32xf32> to vector<8x32xf32>
    %24 = arith.addf %22, %23 : vector<8x32xf32>
    %cst_15 = arith.constant 0.908999979 : f32
    %25 = vector.broadcast %cst_15 : f32 to vector<8x32xf32>
    %26 = arith.mulf %25, %24 : vector<8x32xf32>
    %27 = arith.negf %24 : vector<8x32xf32>
    %28 = math.exp %27 : vector<8x32xf32>
    %cst_16 = arith.constant 1.000000e+00 : f32
    %29 = vector.broadcast %cst_16 : f32 to vector<8x32xf32>
    %30 = arith.addf %29, %28 : vector<8x32xf32>
    %31 = arith.divf %29, %30 : vector<8x32xf32>
    %32 = arith.mulf %26, %31 : vector<8x32xf32>
    %c0_17 = arith.constant 0 : index
    %c0_18 = arith.constant 0 : index
    %33 = vector.load %arg8[%c0_17, %c0_18] : memref<32x256xf32, #tpu.memory_space<vmem>>, vector<32x256xf32>
    %c0_19 = arith.constant 0 : index
    %c0_20 = arith.constant 0 : index
    %34 = vector.load %arg9[%c0_19, %c0_20] : memref<1x256xf32, #tpu.memory_space<vmem>>, vector<1x256xf32>
    %cst_21 = arith.constant dense<0.000000e+00> : vector<8x256xf32>
    %35 = tpu.matmul %32, %33, %cst_21 {dimension_numbers = #tpu.dot_dimension_numbers<[1], [0], [0], [1], [0, 0, 1, 1], [], []>} : vector<8x32xf32>, vector<32x256xf32>, vector<8x256xf32> -> vector<8x256xf32>
    %36 = vector.broadcast %34 : vector<1x256xf32> to vector<8x256xf32>
    %37 = arith.addf %35, %36 : vector<8x256xf32>
    %c0_22 = arith.constant 0 : index
    %c0_23 = arith.constant 0 : index
    %38 = vector.load %arg10[%c0_22, %c0_23] : memref<8x256xf32, #tpu.memory_space<vmem>>, vector<8x256xf32>
    tpu.vector_store %arg10[%c0_22, %c0_23], %37 {strides = array<i32>} : memref<8x256xf32, #tpu.memory_space<vmem>>, vector<8x256xf32>,
    return
  }
  func.func @transform_0(%arg0: i32) -> i32 {
    %c0_i32 = arith.constant 0 : i32
    %c0_i32_0 = arith.constant 0 : i32
    return %c0_i32 : i32
  }
  func.func @transform_1(%arg0: i32) -> (i32, i32) {
    %c0_i32 = arith.constant 0 : i32
    %c0_i32_0 = arith.constant 0 : i32
    return %arg0, %c0_i32 : i32, i32
  }
  func.func @transform_2(%arg0: i32) -> (i32, i32) {
    %c0_i32 = arith.constant 0 : i32
    %c0_i32_0 = arith.constant 0 : i32
    %c0_i32_1 = arith.constant 0 : i32
    return %c0_i32, %c0_i32_0 : i32, i32
  }
  func.func @transform_3(%arg0: i32) -> (i32, i32) {
    %c0_i32 = arith.constant 0 : i32
    %c0_i32_0 = arith.constant 0 : i32
    %c0_i32_1 = arith.constant 0 : i32
    return %c0_i32, %c0_i32_0 : i32, i32
  }
  func.func @transform_4(%arg0: i32) -> (i32, i32) {
    %c0_i32 = arith.constant 0 : i32
    %c0_i32_0 = arith.constant 0 : i32
    %c0_i32_1 = arith.constant 0 : i32
    return %c0_i32, %c0_i32_0 : i32, i32
  }
  func.func @transform_5(%arg0: i32) -> (i32, i32) {
    %c0_i32 = arith.constant 0 : i32
    %c0_i32_0 = arith.constant 0 : i32
    %c0_i32_1 = arith.constant 0 : i32
    return %c0_i32, %c0_i32_0 : i32, i32
  }
  func.func @transform_6(%arg0: i32) -> (i32, i32) {
    %c0_i32 = arith.constant 0 : i32
    %c0_i32_0 = arith.constant 0 : i32
    %c0_i32_1 = arith.constant 0 : i32
    return %c0_i32, %c0_i32_0 : i32, i32
  }
  func.func @transform_7(%arg0: i32) -> (i32, i32) {
    %c0_i32 = arith.constant 0 : i32
    %c0_i32_0 = arith.constant 0 : i32
    %c0_i32_1 = arith.constant 0 : i32
    return %c0_i32, %c0_i32_0 : i32, i32
  }
  func.func @transform_8(%arg0: i32) -> (i32, i32) {
    %c0_i32 = arith.constant 0 : i32
    %c0_i32_0 = arith.constant 0 : i32
    %c0_i32_1 = arith.constant 0 : i32
    return %c0_i32, %c0_i32_0 : i32, i32
  }
  func.func @transform_9(%arg0: i32) -> (i32, i32) {
    %c0_i32 = arith.constant 0 : i32
    %c0_i32_0 = arith.constant 0 : i32
    return %arg0, %c0_i32 : i32, i32
  }
}

</mosaic_0001>

<llo_original>
// kernel: tpu_custom_call.1
$region0: #{tpu_custom_call.1}
  #allocation0 [shape = 'u32[]', space=smem, size = 0x4, offset = 0x4, fixed_abs, tag = 'smem constant byte address 0x4 - core index']
  #allocation1 [shape = 'u32[144,128]{1,0:T(1,128)}', space=vmem, size = 0x12000, scoped, tag = 'internal scratch']
  #allocation2 [shape = 'f32[1]{0:T(128)S(6)}', space=smem, size = 0x200, scoped, tag = 'scoped memory for tpu_custom_call.1']
  %s0 = inlined_call_operand.<no memory space> [shape: f32[1], index: 0, kind: input, shape index: {}]
  %s1 = inlined_call_operand.hbm [shape: f32[8,32], index: 1, kind: input, shape index: {}]
  %s2 = inlined_call_operand.hbm [shape: f32[32,32], index: 2, kind: input, shape index: {}]
  %s3 = inlined_call_operand.vmem [shape: f32[1,32], index: 3, kind: input, shape index: {}]
  %s4 = inlined_call_operand.vmem [shape: f32[1,32], index: 4, kind: input, shape index: {}]
  %s5 = inlined_call_operand.hbm [shape: f32[32,32], index: 5, kind: input, shape index: {}]
  %s6 = inlined_call_operand.vmem [shape: f32[1,32], index: 6, kind: input, shape index: {}]
  %s7 = inlined_call_operand.hbm [shape: f32[32,256], index: 7, kind: input, shape index: {}]
  %s8 = inlined_call_operand.vmem [shape: f32[1,256], index: 8, kind: input, shape index: {}]
  %s9 = inlined_call_operand.hbm [shape: f32[8,256], index: 9, kind: output, shape index: {}]
  %s10 = sld [smem:[#allocation0]]
  $region62: #{tpu_custom_call.1} parent=0
    _
  %s12 = ssub.s32 1, %s10
  %s13 = scalar_select 0, %s12, %s10
  %14 = sst [smem:[#allocation2]] %s0
  $region1: #{tpu_custom_call.1} parent=0
    #allocation3 [shape = 'u8[4096]{0}', space=vmem, size = 0x1000, scoped, tag = 'input window, operand 1, single buffered']
    #allocation4 [shape = 's32[1]{0}', space=sflag, size = 0x4, scoped, tag = 'scoped memory for tpu_custom_call.1']
    #allocation5 [shape = 's32[1]{0}', space=sflag, size = 0x4, scoped, tag = 'scoped memory for tpu_custom_call.1']
    #allocation6 [shape = 'u8[16384]{0}', space=vmem, size = 0x4000, scoped, tag = 'input window, operand 2, single buffered']
    #allocation7 [shape = 's32[1]{0}', space=sflag, size = 0x4, scoped, tag = 'scoped memory for tpu_custom_call.1']
    #allocation8 [shape = 'u8[16384]{0}', space=vmem, size = 0x4000, scoped, tag = 'input window, operand 5, single buffered']
    #allocation9 [shape = 'u8[32768]{0}', space=vmem, size = 0x8000, scoped, tag = 'input window, operand 7, single buffered']
    #allocation10 [shape = 's32[1]{0}', space=sflag, size = 0x4, scoped, tag = 'scoped memory for tpu_custom_call.1']
    #allocation11 [shape = 'u8[8192]{0}', space=vmem, size = 0x2000, scoped, tag = 'output window, operand 0, single buffered']
    %15 = vsyncpa [#allocation4], 0
    %16 = vsyncpa [#allocation7], 0
    %17 = vsyncpa [#allocation10], 0
    %18 = vsyncpa [#allocation5], 0
    // Predicated region
    $region2: #{tpu_custom_call.1} parent=1 // pred_check
      _
    $region3: #{tpu_custom_call.1} parent=1 // pred_check_branch
      %20 = sbr.rel (0) target = $region5
    $region4: #{tpu_custom_call.1} parent=1 // pred_region
      _
    $region5: #{tpu_custom_call.1} parent=1 // pred_fallthru
      _
    // Predicated region
    $region6: #{tpu_custom_call.1} parent=1 // pred_check
      _
    $region7: #{tpu_custom_call.1} parent=1 // pred_check_branch
      %22 = sbr.rel (0) target = $region9
    $region8: #{tpu_custom_call.1} parent=1 // pred_region
      %s24 = ssub.s32 128, 128
      %25 = vsyncadd [#allocation4], %s24
      %s27 = sshll.u32 [#allocation3], 4
      %s28 = int_to_ptr.vmem [resolvable:$true] %s27
      %30 = dma.hbm_to_vmem [thread:$0]  %s1, 128, %s28, [#allocation4]
    $region9: #{tpu_custom_call.1} parent=1 // pred_fallthru
      _
    // Predicated region
    $region10: #{tpu_custom_call.1} parent=1 // pred_check
      _
    $region11: #{tpu_custom_call.1} parent=1 // pred_check_branch
      %32 = sbr.rel (0) target = $region13
    $region12: #{tpu_custom_call.1} parent=1 // pred_region
      %s34 = ssub.s32 512, 512
      %35 = vsyncadd [#allocation7], %s34
      %s36 = sshll.u32 [#allocation6], 4
      %s37 = int_to_ptr.vmem [resolvable:$true] %s36
      %42 = dma.hbm_to_vmem [thread:$0]  %s2, 512, %s37, [#allocation7], 128, 128, 8
    $region13: #{tpu_custom_call.1} parent=1 // pred_fallthru
      _
    // Predicated region
    $region14: #{tpu_custom_call.1} parent=1 // pred_check
      _
    $region15: #{tpu_custom_call.1} parent=1 // pred_check_branch
      %44 = sbr.rel (0) target = $region17
    $region16: #{tpu_custom_call.1} parent=1 // pred_region
      _
    $region17: #{tpu_custom_call.1} parent=1 // pred_fallthru
      _
    // Predicated region
    $region18: #{tpu_custom_call.1} parent=1 // pred_check
      _
    $region19: #{tpu_custom_call.1} parent=1 // pred_check_branch
      %46 = sbr.rel (0) target = $region21
    $region20: #{tpu_custom_call.1} parent=1 // pred_region
      _
    $region21: #{tpu_custom_call.1} parent=1 // pred_fallthru
      _
    // Predicated region
    $region22: #{tpu_custom_call.1} parent=1 // pred_check
      _
    $region23: #{tpu_custom_call.1} parent=1 // pred_check_branch
      %48 = sbr.rel (0) target = $region25
    $region24: #{tpu_custom_call.1} parent=1 // pred_region
      %s50 = ssub.s32 512, 512
      %51 = vsyncadd [#allocation7], %s50
      %s52 = sshll.u32 [#allocation8], 4
      %s53 = int_to_ptr.vmem [resolvable:$true] %s52
      %58 = dma.hbm_to_vmem [thread:$0]  %s5, 512, %s53, [#allocation7], 128, 128, 8
    $region25: #{tpu_custom_call.1} parent=1 // pred_fallthru
      _
    // Predicated region
    $region26: #{tpu_custom_call.1} parent=1 // pred_check
      _
    $region27: #{tpu_custom_call.1} parent=1 // pred_check_branch
      %60 = sbr.rel (0) target = $region29
    $region28: #{tpu_custom_call.1} parent=1 // pred_region
      _
    $region29: #{tpu_custom_call.1} parent=1 // pred_fallthru
      _
    // Predicated region
    $region30: #{tpu_custom_call.1} parent=1 // pred_check
      _
    $region31: #{tpu_custom_call.1} parent=1 // pred_check_branch
      %62 = sbr.rel (0) target = $region33
    $region32: #{tpu_custom_call.1} parent=1 // pred_region
      %s64 = ssub.s32 1024, 1024
      %65 = vsyncadd [#allocation10], %s64
      %s66 = sshll.u32 [#allocation9], 4
      %s67 = int_to_ptr.vmem [resolvable:$true] %s66
      %72 = dma.hbm_to_vmem [thread:$0]  %s7, 1024, %s67, [#allocation10], 256, 256, 16
    $region33: #{tpu_custom_call.1} parent=1 // pred_fallthru
      _
    // Predicated region
    $region34: #{tpu_custom_call.1} parent=1 // pred_check
      _
    $region35: #{tpu_custom_call.1} parent=1 // pred_check_branch
      %74 = sbr.rel (0) target = $region37
    $region36: #{tpu_custom_call.1} parent=1 // pred_region
      _
    $region37: #{tpu_custom_call.1} parent=1 // pred_fallthru
      _
    // Predicated region
    $region38: #{tpu_custom_call.1} parent=1 // pred_check
      _
    $region39: #{tpu_custom_call.1} parent=1 // pred_check_branch
      %76 = sbr.rel (0) target = $region41
    $region40: #{tpu_custom_call.1} parent=1 // pred_region
      %77 = dma.done [#allocation4], 128
    $region41: #{tpu_custom_call.1} parent=1 // pred_fallthru
      _
    // Predicated region
    $region42: #{tpu_custom_call.1} parent=1 // pred_check
      _
    $region43: #{tpu_custom_call.1} parent=1 // pred_check_branch
      %79 = sbr.rel (0) target = $region45
    $region44: #{tpu_custom_call.1} parent=1 // pred_region
      %80 = dma.done [#allocation7], 512
    $region45: #{tpu_custom_call.1} parent=1 // pred_fallthru
      _
    // Predicated region
    $region46: #{tpu_custom_call.1} parent=1 // pred_check
      _
    $region47: #{tpu_custom_call.1} parent=1 // pred_check_branch
      %82 = sbr.rel (0) target = $region49
    $region48: #{tpu_custom_call.1} parent=1 // pred_region
      %83 = dma.done [#allocation7], 512
    $region49: #{tpu_custom_call.1} parent=1 // pred_fallthru
      _
    // Predicated region
    $region50: #{tpu_custom_call.1} parent=1 // pred_check
      _
    $region51: #{tpu_custom_call.1} parent=1 // pred_check_branch
      %85 = sbr.rel (0) target = $region53
    $region52: #{tpu_custom_call.1} parent=1 // pred_region
      %86 = dma.done [#allocation10], 1024
    $region53: #{tpu_custom_call.1} parent=1 // pred_fallthru
      _
    %s87 = sld [smem:[#allocation2]]
    %v88 = vld [vmem:[#allocation3] sm:$0xff]
    %v89 = vld [vmem:[#allocation6] sm:$0xff]
    %v90 = vld [vmem:[#allocation6 + $0x8] sm:$0xff]
    %v91 = vld [vmem:[#allocation6 + $0x10] sm:$0xff]
    %v92 = vld [vmem:[#allocation6 + $0x18] sm:$0xff]
    %v93 = vld [vmem:[%s3] sm:$0x1]
    %v94 = vld [vmem:[%s4] sm:$0x1]
    %v95 = vstv %s87
    %v96 = vmul.f32 %v95, %v93
    %v98 = vlaneseq
    %v99 = vshrl.u32 %v98, 7
    %v100 = vsub.s32 0, %v99
    %v101 = vrot.slane %v96, %v100
    %vm103 = vcmask 261120
    %v105 = vsel %vm103, %v88, 0
    %107 = vmatprep.subr.mxu0 0.0
    %108 = vmatpush1.msra.mxu0 %v89
    %109 = vmatprep.subr.mxu0 0.0
    %110 = vmatpush1.msra.mxu0 %v90
    %111 = vmatprep.subr.mxu0 0.0
    %112 = vmatpush1.msra.mxu0 %v91
    %113 = vmatprep.subr.mxu0 0.0
    %114 = vmatpush1.msra.mxu0 %v92
    %115 = vmatprep.subr.mxu0 0.0
    %116 = vmatpush1.msra.mxu0 0.0
    %117 = vmatprep.subr.mxu0 0.0
    %118 = vmatpush1.msra.mxu0 0.0
    %119 = vmatprep.subr.mxu0 0.0
    %120 = vmatpush1.msra.mxu0 0.0
    %121 = vmatprep.subr.mxu0 0.0
    %122 = vmatpush1.msra.mxu0 0.0
    %123 = vmatprep.subr.mxu0 0.0
    %124 = vmatpush1.msra.mxu0 0.0
    %125 = vmatprep.subr.mxu0 0.0
    %126 = vmatpush1.msra.mxu0 0.0
    %127 = vmatprep.subr.mxu0 0.0
    %128 = vmatpush1.msra.mxu0 0.0
    %129 = vmatprep.subr.mxu0 0.0
    %130 = vmatpush1.msra.mxu0 0.0
    %131 = vmatprep.subr.mxu0 0.0
    %132 = vmatpush1.msra.mxu0 0.0
    %133 = vmatprep.subr.mxu0 0.0
    %134 = vmatpush1.msra.mxu0 0.0
    %135 = vmatprep.subr.mxu0 0.0
    %136 = vmatpush1.msra.mxu0 0.0
    %137 = vmatprep.subr.mxu0 0.0
    %138 = vmatpush1.msra.mxu0 0.0
    %139 = vmatprep.subr.mxu0 0.0
    %140 = vmatpush1.msra.mxu0 0.0
    %141 = vmatprep.subr.mxu0 0.0
    %142 = vmatpush1.msra.mxu0 0.0
    %143 = vmatprep.subr.mxu0 0.0
    %144 = vmatpush1.msra.mxu0 0.0
    %145 = vmatprep.subr.mxu0 0.0
    %146 = vmatpush1.msra.mxu0 0.0
    %147 = vmatprep.subr.mxu0 0.0
    %148 = vmatpush1.msra.mxu0 0.0
    %149 = vmatprep.subr.mxu0 0.0
    %150 = vmatpush1.msra.mxu0 0.0
    %151 = vmatprep.subr.mxu0 0.0
    %152 = vmatpush1.msra.mxu0 0.0
    %153 = vmatprep.subr.mxu0 0.0
    %154 = vmatpush1.msra.mxu0 0.0
    %155 = vmatprep.subr.mxu0 0.0
    %156 = vmatpush1.msra.mxu0 0.0
    %157 = vmatprep.subr.mxu0 0.0
    %158 = vmatpush1.msra.mxu0 0.0
    %159 = vmatprep.subr.mxu0 0.0
    %160 = vmatpush1.msra.mxu0 0.0
    %161 = vmatprep.subr.mxu0 0.0
    %162 = vmatpush1.msra.mxu0 0.0
    %163 = vmatprep.subr.mxu0 0.0
    %164 = vmatpush1.msra.mxu0 0.0
    %165 = vmatprep.subr.mxu0 0.0
    %166 = vmatpush1.msra.mxu0 0.0
    %167 = vmatprep.subr.mxu0 0.0
    %168 = vmatpush1.msra.mxu0 0.0
    %169 = vmatprep.subr.mxu0 0.0
    %170 = vmatpush1.msra.mxu0 0.0
    %171 = vmatprep.mubr.f32.mxu0 0.0
    %172 = vmatmul.mubr.f32.gmra.mrb[0].mxu0 %v105
    %v173 = vpop.f32.mrb[0].mxu0
    %v174 = vadd.f32 %v101, %v173
    %v175 = vpop.f32.mrb[0].mxu0
    %176 = vdwg.mxu0
    %v178 = vlaneseq
    %v179 = vshrl.u32 %v178, 7
    %v180 = vsub.s32 0, %v179
    %v181 = vrot.slane %v94, %v180
    %v183 = vadd.f32 %v174, %v181
    %v184 = vmul.f32 %v183, 0.909
    %v185 = vxor.u32 %v183, 2147483648
    %v186 = vmul.f32 %v185, 1.442695
    %v187 = vpow.pop %v186
    %v188 = vadd.f32 %v187, 1.0
    %v189 = vrcp.pop %v188
    %v190 = vmul.f32 1.0, %v189
    %v191 = vmul.f32 %v184, %v190
    %v192 = vld [vmem:[#allocation8] sm:$0xff]
    %v193 = vld [vmem:[#allocation8 + $0x8] sm:$0xff]
    %v194 = vld [vmem:[#allocation8 + $0x10] sm:$0xff]
    %v195 = vld [vmem:[#allocation8 + $0x18] sm:$0xff]
    %v196 = vld [vmem:[%s6] sm:$0x1]
    %v198 = vlaneseq
    %v199 = vshrl.u32 %v198, 7
    %v200 = vsub.s32 0, %v199
    %v201 = vrot.slane %v196, %v200
    %v204 = vsel %vm103, %v191, 0
    %206 = vmatprep.subr.mxu0 0.0
    %207 = vmatpush1.msra.mxu0 %v192
    %208 = vmatprep.subr.mxu0 0.0
    %209 = vmatpush1.msra.mxu0 %v193
    %210 = vmatprep.subr.mxu0 0.0
    %211 = vmatpush1.msra.mxu0 %v194
    %212 = vmatprep.subr.mxu0 0.0
    %213 = vmatpush1.msra.mxu0 %v195
    %214 = vmatprep.subr.mxu0 0.0
    %215 = vmatpush1.msra.mxu0 0.0
    %216 = vmatprep.subr.mxu0 0.0
    %217 = vmatpush1.msra.mxu0 0.0
    %218 = vmatprep.subr.mxu0 0.0
    %219 = vmatpush1.msra.mxu0 0.0
    %220 = vmatprep.subr.mxu0 0.0
    %221 = vmatpush1.msra.mxu0 0.0
    %222 = vmatprep.subr.mxu0 0.0
    %223 = vmatpush1.msra.mxu0 0.0
    %224 = vmatprep.subr.mxu0 0.0
    %225 = vmatpush1.msra.mxu0 0.0
    %226 = vmatprep.subr.mxu0 0.0
    %227 = vmatpush1.msra.mxu0 0.0
    %228 = vmatprep.subr.mxu0 0.0
    %229 = vmatpush1.msra.mxu0 0.0
    %230 = vmatprep.subr.mxu0 0.0
    %231 = vmatpush1.msra.mxu0 0.0
    %232 = vmatprep.subr.mxu0 0.0
    %233 = vmatpush1.msra.mxu0 0.0
    %234 = vmatprep.subr.mxu0 0.0
    %235 = vmatpush1.msra.mxu0 0.0
    %236 = vmatprep.subr.mxu0 0.0
    %237 = vmatpush1.msra.mxu0 0.0
    %238 = vmatprep.subr.mxu0 0.0
    %239 = vmatpush1.msra.mxu0 0.0
    %240 = vmatprep.subr.mxu0 0.0
    %241 = vmatpush1.msra.mxu0 0.0
    %242 = vmatprep.subr.mxu0 0.0
    %243 = vmatpush1.msra.mxu0 0.0
    %244 = vmatprep.subr.mxu0 0.0
    %245 = vmatpush1.msra.mxu0 0.0
    %246 = vmatprep.subr.mxu0 0.0
    %247 = vmatpush1.msra.mxu0 0.0
    %248 = vmatprep.subr.mxu0 0.0
    %249 = vmatpush1.msra.mxu0 0.0
    %250 = vmatprep.subr.mxu0 0.0
    %251 = vmatpush1.msra.mxu0 0.0
    %252 = vmatprep.subr.mxu0 0.0
    %253 = vmatpush1.msra.mxu0 0.0
    %254 = vmatprep.subr.mxu0 0.0
    %255 = vmatpush1.msra.mxu0 0.0
    %256 = vmatprep.subr.mxu0 0.0
    %257 = vmatpush1.msra.mxu0 0.0
    %258 = vmatprep.subr.mxu0 0.0
    %259 = vmatpush1.msra.mxu0 0.0
    %260 = vmatprep.subr.mxu0 0.0
    %261 = vmatpush1.msra.mxu0 0.0
    %262 = vmatprep.subr.mxu0 0.0
    %263 = vmatpush1.msra.mxu0 0.0
    %264 = vmatprep.subr.mxu0 0.0
    %265 = vmatpush1.msra.mxu0 0.0
    %266 = vmatprep.subr.mxu0 0.0
    %267 = vmatpush1.msra.mxu0 0.0
    %268 = vmatprep.subr.mxu0 0.0
    %269 = vmatpush1.msra.mxu0 0.0
    %270 = vmatprep.mubr.f32.mxu0 0.0
    %271 = vmatmul.mubr.f32.gmra.mrb[0].mxu0 %v204
    %v272 = vpop.f32.mrb[0].mxu0
    %v273 = vadd.f32 %v201, %v272
    %v274 = vpop.f32.mrb[0].mxu0
    %275 = vdwg.mxu0
    %v276 = vmul.f32 %v273, 0.909
    %v277 = vxor.u32 %v273, 2147483648
    %v278 = vmul.f32 %v277, 1.442695
    %v279 = vpow.pop %v278
    %v280 = vadd.f32 %v279, 1.0
    %v281 = vrcp.pop %v280
    %v282 = vmul.f32 1.0, %v281
    %v283 = vmul.f32 %v276, %v282
    %v284 = vld [vmem:[#allocation9] sm:$0xff]
    %v285 = vld [vmem:[#allocation9 + $0x8] sm:$0xff]
    %v286 = vld [vmem:[#allocation9 + $0x10] sm:$0xff]
    %v287 = vld [vmem:[#allocation9 + $0x18] sm:$0xff]
    %v288 = vld [vmem:[#allocation9 + $0x20] sm:$0xff]
    %v289 = vld [vmem:[#allocation9 + $0x28] sm:$0xff]
    %v290 = vld [vmem:[#allocation9 + $0x30] sm:$0xff]
    %v291 = vld [vmem:[#allocation9 + $0x38] sm:$0xff]
    %v292 = vld [vmem:[%s8] sm:$0x3]
    %v294 = vlaneseq
    %v295 = vshrl.u32 %v294, 7
    %v296 = vsub.s32 0, %v295
    %v297 = vrot.slane %v292, %v296
    %v298 = vlaneseq
    %v299 = vshrl.u32 %v298, 7
    %v300 = vsub.s32 1, %v299
    %v301 = vrot.slane %v292, %v300
    %v305 = vsel %vm103, %v283, 0
    %307 = vmatprep.subr.mxu0 %v285
    %308 = vmatpush1.msra.mxu0 %v284
    %309 = vmatprep.subr.mxu0 %v287
    %310 = vmatpush1.msra.mxu0 %v286
    %311 = vmatprep.subr.mxu0 %v289
    %312 = vmatpush1.msra.mxu0 %v288
    %313 = vmatprep.subr.mxu0 %v291
    %314 = vmatpush1.msra.mxu0 %v290
    %315 = vmatprep.subr.mxu0 0.0
    %316 = vmatpush1.msra.mxu0 0.0
    %317 = vmatprep.subr.mxu0 0.0
    %318 = vmatpush1.msra.mxu0 0.0
    %319 = vmatprep.subr.mxu0 0.0
    %320 = vmatpush1.msra.mxu0 0.0
    %321 = vmatprep.subr.mxu0 0.0
    %322 = vmatpush1.msra.mxu0 0.0
    %323 = vmatprep.subr.mxu0 0.0
    %324 = vmatpush1.msra.mxu0 0.0
    %325 = vmatprep.subr.mxu0 0.0
    %326 = vmatpush1.msra.mxu0 0.0
    %327 = vmatprep.subr.mxu0 0.0
    %328 = vmatpush1.msra.mxu0 0.0
    %329 = vmatprep.subr.mxu0 0.0
    %330 = vmatpush1.msra.mxu0 0.0
    %331 = vmatprep.subr.mxu0 0.0
    %332 = vmatpush1.msra.mxu0 0.0
    %333 = vmatprep.subr.mxu0 0.0
    %334 = vmatpush1.msra.mxu0 0.0
    %335 = vmatprep.subr.mxu0 0.0
    %336 = vmatpush1.msra.mxu0 0.0
    %337 = vmatprep.subr.mxu0 0.0
    %338 = vmatpush1.msra.mxu0 0.0
    %339 = vmatprep.subr.mxu0 0.0
    %340 = vmatpush1.msra.mxu0 0.0
    %341 = vmatprep.subr.mxu0 0.0
    %342 = vmatpush1.msra.mxu0 0.0
    %343 = vmatprep.subr.mxu0 0.0
    %344 = vmatpush1.msra.mxu0 0.0
    %345 = vmatprep.subr.mxu0 0.0
    %346 = vmatpush1.msra.mxu0 0.0
    %347 = vmatprep.subr.mxu0 0.0
    %348 = vmatpush1.msra.mxu0 0.0
    %349 = vmatprep.subr.mxu0 0.0
    %350 = vmatpush1.msra.mxu0 0.0
    %351 = vmatprep.subr.mxu0 0.0
    %352 = vmatpush1.msra.mxu0 0.0
    %353 = vmatprep.subr.mxu0 0.0
    %354 = vmatpush1.msra.mxu0 0.0
    %355 = vmatprep.subr.mxu0 0.0
    %356 = vmatpush1.msra.mxu0 0.0
    %357 = vmatprep.subr.mxu0 0.0
    %358 = vmatpush1.msra.mxu0 0.0
    %359 = vmatprep.subr.mxu0 0.0
    %360 = vmatpush1.msra.mxu0 0.0
    %361 = vmatprep.subr.mxu0 0.0
    %362 = vmatpush1.msra.mxu0 0.0
    %363 = vmatprep.subr.mxu0 0.0
    %364 = vmatpush1.msra.mxu0 0.0
    %365 = vmatprep.subr.mxu0 0.0
    %366 = vmatpush1.msra.mxu0 0.0
    %367 = vmatprep.subr.mxu0 0.0
    %368 = vmatpush1.msra.mxu0 0.0
    %369 = vmatprep.subr.mxu0 0.0
    %370 = vmatpush1.msra.mxu0 0.0
    %371 = vmatprep.mubr.f32.mxu0 0.0
    %372 = vmatmul.mubr.f32.gmra.mrb[0].mxu0 %v305
    %v373 = vpop.f32.mrb[0].mxu0
    %v374 = vadd.f32 %v297, %v373
    %v375 = vpop.f32.mrb[0].mxu0
    %v376 = vadd.f32 %v301, %v375
    %377 = vdwg.mxu0
    %378 = vst [vmem:[#allocation11] sm:$0xff] %v374
    %379 = vst [vmem:[#allocation11 + $0x8] sm:$0xff] %v376
    // Predicated region
    $region54: #{tpu_custom_call.1} parent=1 // pred_check
      _
    $region55: #{tpu_custom_call.1} parent=1 // pred_check_branch
      %381 = sbr.rel (0) target = $region57
    $region56: #{tpu_custom_call.1} parent=1 // pred_region
      %s383 = ssub.s32 256, 256
      %384 = vsyncadd [#allocation5], %s383
      %s386 = sshll.u32 [#allocation11], 4
      %s387 = int_to_ptr.vmem [resolvable:$true] %s386
      %389 = dma.vmem_to_hbm [thread:$0]  %s387, 256, %s9, [#allocation5]
    $region57: #{tpu_custom_call.1} parent=1 // pred_fallthru
      _
    // Predicated region
    $region58: #{tpu_custom_call.1} parent=1 // pred_check
      _
    $region59: #{tpu_custom_call.1} parent=1 // pred_check_branch
      %391 = sbr.rel (0) target = $region61
    $region60: #{tpu_custom_call.1} parent=1 // pred_region
      %392 = dma.done [#allocation5], 256
    $region61: #{tpu_custom_call.1} parent=1 // pred_fallthru
      _
    %393 = vsyncpa [#allocation4], 1
    %394 = vsyncpa [#allocation7], 1
    %395 = vsyncpa [#allocation10], 1
    %396 = vsyncpa [#allocation5], 1

</llo_original>
